<compile_context>
chip_gen: v5e
topology: v5e:2x2
jax: 0.10.0
libtpu: 0.0.40
codegen_flags: <defaults>
</compile_context>

<pallas_src>
import functools
import math

import jax
import jax.numpy as jnp
from jax import lax
from jax.experimental import pallas as pl
from jax.experimental.pallas import tpu as pltpu


# ---------------------------------------------------------------------------
# VMEM limit heuristic (v5e/v6e: 128 MiB physical; v7x: 64 MiB physical).
# ---------------------------------------------------------------------------
def _pick_vmem_limit_bytes():
    cap = None
    try:
        cap = getattr(pltpu.get_tpu_info(), "vmem_capacity_bytes", None)
    except Exception:
        cap = None
    if not cap:
        cap = 64 * 1024 * 1024  # conservative default (v7x-sized)
    return 96 * 1024 * 1024 if cap >= 128 * 1024 * 1024 else 32 * 1024 * 1024


# ---------------------------------------------------------------------------
# Stage 1: fused Q/K/V projection.  One matmul per token per projection; the
# 1/sqrt(head_dim) scale is folded into Q so the attention kernel never scales
# scores.  Weights arrive as a single (3, E, E) slab already cast to mxu_dtype.
# ---------------------------------------------------------------------------
def _qkv_proj_kernel(xq_ref, xk_ref, xv_ref, w_ref, b_ref,
                     q_ref, k_ref, v_ref, *, scale, mxu_dtype):
    def mm(x, w):  # MXU matmul: bf16 (default) operands, f32 accumulation.
        return jnp.dot(x.astype(mxu_dtype), w, preferred_element_type=jnp.float32)

    q = mm(xq_ref[0], w_ref[0]) + b_ref[0]          # (ts, E) f32
    k = mm(xk_ref[0], w_ref[1]) + b_ref[1]
    v = mm(xv_ref[0], w_ref[2]) + b_ref[2]
    q_ref[0] = (q * scale).astype(q_ref.dtype)
    k_ref[0] = k.astype(k_ref.dtype)
    v_ref[0] = v.astype(v_ref.dtype)


# ---------------------------------------------------------------------------
# Stage 2: flash-style attention.  grid = (B, H, q_tiles, k_tiles); the output
# block (b, h, qi) is resident across the innermost "arbitrary" k-tile axis and
# finalized on the last key tile.
# ---------------------------------------------------------------------------
def _attn_prologue(m_sc, l_sc, acc_sc):
    @pl.when(pl.program_id(3) == 0)
    def _init():
        # Finite "minus infinity": keeps exp(m_prev - m_new) NaN-free even when
        # a whole key tile is masked.
        m_sc[...] = jnp.full_like(m_sc, -1e30)
        l_sc[...] = jnp.zeros_like(l_sc)
        acc_sc[...] = jnp.zeros_like(acc_sc)


def _attn_epilogue(o_ref, m_sc, l_sc, acc_sc):
    @pl.when(pl.program_id(3) == pl.num_programs(3) - 1)
    def _fin():
        inv = pl.reciprocal(l_sc[...], approx=True)   # EUP slot, off the VALU path
        o_ref[0, 0] = (acc_sc[...] * inv).astype(o_ref.dtype)


def _flash_update(q_ref, k_ref, v_ref, m_sc, l_sc, acc_sc, keep, mxu_dtype):
    q = q_ref[0, 0]                                   # (tq, D), already scaled
    k = k_ref[0, 0]                                   # (tk, D)
    v = v_ref[0, 0]                                   # (tk, D)

    # Scores: contract last axes of both operands — no explicit k transpose.
    s = lax.dot_general(q.astype(mxu_dtype), k.astype(mxu_dtype),
                        (((1,), (1,)), ((), ())),
                        preferred_element_type=jnp.float32)      # (tq, tk) f32
    if keep is not None:
        s = jnp.where(keep, s, -1e30)

    m_prev = m_sc[...]
    m_new = jnp.maximum(m_prev, jnp.max(s, axis=-1, keepdims=True))
    alpha = jnp.exp(m_prev - m_new)
    p = jnp.exp(s - m_new)
    if keep is not None:
        # Multiplicative zeroing: exact even for fully-masked key tiles.
        p = jnp.where(keep, p, 0.0)

    l_sc[...] = alpha * l_sc[...] + jnp.sum(p, axis=-1, keepdims=True)
    acc_sc[...] = alpha * acc_sc[...] + jnp.dot(
        p.astype(mxu_dtype), v.astype(mxu_dtype),
        preferred_element_type=jnp.float32)
    m_sc[...] = m_new


def _attn_kernel(q_ref, k_ref, v_ref, o_ref, m_sc, l_sc, acc_sc,
                 *, causal, tq, tk, mxu_dtype):
    """Causal mask generated in-kernel (or no mask when causal=False)."""
    _attn_prologue(m_sc, l_sc, acc_sc)
    qi = pl.program_id(2)
    ki = pl.program_id(3)
    if causal:
        # Skip key tiles that lie entirely above the diagonal for this q tile.
        @pl.when(ki * tk <= qi * tq + (tq - 1))
        def _():
            row = qi * tq + lax.broadcasted_iota(jnp.int32, (tq, tk), 0)
            col = ki * tk + lax.broadcasted_iota(jnp.int32, (tq, tk), 1)
            _flash_update(q_ref, k_ref, v_ref, m_sc, l_sc, acc_sc,
                          keep=(col <= row), mxu_dtype=mxu_dtype)
    else:
        _flash_update(q_ref, k_ref, v_ref, m_sc, l_sc, acc_sc,
                      keep=None, mxu_dtype=mxu_dtype)
    _attn_epilogue(o_ref, m_sc, l_sc, acc_sc)


def _attn_kernel_dense_mask(mask_ref, q_ref, k_ref, v_ref, o_ref,
                            m_sc, l_sc, acc_sc, *, mxu_dtype):
    """Arbitrary (S, S) mask; mask == 0 => masked (PyTorch masked_fill semantics)."""
    _attn_prologue(m_sc, l_sc, acc_sc)
    keep = mask_ref[...] != 0
    _flash_update(q_ref, k_ref, v_ref, m_sc, l_sc, acc_sc,
                  keep=keep, mxu_dtype=mxu_dtype)
    _attn_epilogue(o_ref, m_sc, l_sc, acc_sc)


# ---------------------------------------------------------------------------
# Stage 3: output projection — one lane-dense (ts, E) @ (E, E) matmul + bias.
# ---------------------------------------------------------------------------
def _out_proj_kernel(x_ref, w_ref, b_ref, o_ref, *, mxu_dtype):
    y = jnp.dot(x_ref[0].astype(mxu_dtype), w_ref[...],
                preferred_element_type=jnp.float32) + b_ref[...]
    o_ref[0] = y.astype(o_ref.dtype)


# ---------------------------------------------------------------------------
# Wrapper
# ---------------------------------------------------------------------------
def masked_multihead_attention(query, key, value, params, *, num_heads,
                               attn_mask=None, causal=False,
                               q_tile=None, k_tile=None, s_tile=None,
                               mxu_dtype=jnp.bfloat16):
    """query/key/value: (B, S, E) f32.

    params = (wq, bq, wk, bk, wv, bv, wo, bo) with weights stored (in, out) so
    y = x @ W + b  (== nn.Linear with W = W_pt.T); biases have shape (1, E).

    attn_mask: optional (S, S), 0 => masked (PyTorch semantics).  If
    causal=True the causal mask is generated in-kernel and attn_mask must be
    None.  mxu_dtype controls only the MXU operand dtype (f32 accumulation and
    f32 softmax always); pass jnp.float32 for near-exact parity.
    """
    B, S, E = query.shape
    H = num_heads
    D = E // H
    assert D * H == E, "embed_dim must be divisible by num_heads"
    if causal:
        assert attn_mask is None, "pass either causal=True or attn_mask, not both"

    wq, bq, wk, bk, wv, bv, wo, bo = params

    # Tile heuristics (full dim at small S; 128-multiples at large S).
    if s_tile is None:
        s_tile = S if S <= 512 else 512
    if q_tile is None:
        q_tile = S if S <= 256 else 256
    if k_tile is None:
        k_tile = S if S <= 512 else 512
    assert S % s_tile == 0 and S % q_tile == 0 and S % k_tile == 0

    vmem_limit = _pick_vmem_limit_bytes()
    scale = 1.0 / math.sqrt(D)

    # ---------------- Stage 1: Q/K/V projections (once per token) ------------
    wqkv = jnp.stack([wq, wk, wv]).astype(mxu_dtype)     # (3, E, E) one DMA operand
    bqkv = jnp.stack([bq, bk, bv]).astype(jnp.float32)   # (3, 1, E)

    st = S // s_tile
    q, k, v = pl.pallas_call(
        functools.partial(_qkv_proj_kernel, scale=scale, mxu_dtype=mxu_dtype),
        out_shape=(jax.ShapeDtypeStruct((B, S, E), mxu_dtype),
                   jax.ShapeDtypeStruct((B, S, E), mxu_dtype),
                   jax.ShapeDtypeStruct((B, S, E), mxu_dtype)),
        grid_spec=pltpu.PrefetchScalarGridSpec(
            num_scalar_prefetch=0,
            grid=(B, st),
            in_specs=[
                pl.BlockSpec((1, s_tile, E), lambda b, si: (b, si, 0)),   # query
                pl.BlockSpec((1, s_tile, E), lambda b, si: (b, si, 0)),   # key
                pl.BlockSpec((1, s_tile, E), lambda b, si: (b, si, 0)),   # value
                pl.BlockSpec((3, E, E),      lambda b, si: (0, 0, 0)),    # Wq/Wk/Wv
                pl.BlockSpec((3, 1, E),      lambda b, si: (0, 0, 0)),    # biases
            ],
            out_specs=[pl.BlockSpec((1, s_tile, E), lambda b, si: (b, si, 0)),
                       pl.BlockSpec((1, s_tile, E), lambda b, si: (b, si, 0)),
                       pl.BlockSpec((1, s_tile, E), lambda b, si: (b, si, 0))],
        ),
        compiler_params=pltpu.CompilerParams(
            dimension_semantics=("parallel", "parallel"),
            vmem_limit_bytes=vmem_limit),
    )(query, key, value, wqkv, bqkv)

    # One-time layout plumbing (XLA): (B, S, E) -> (B, H, S, D) so every
    # attention block is full and the last dim equals the full head_dim.
    def to_heads(x):
        return x.reshape(B, S, H, D).transpose(0, 2, 1, 3)

    qh, kh, vh = to_heads(q), to_heads(k), to_heads(v)

    # ---------------- Stage 2: flash attention --------------------------------
    qt = S // q_tile
    kt = S // k_tile
    q_spec = pl.BlockSpec((1, 1, q_tile, D), lambda b, h, qi, ki: (b, h, qi, 0))
    kv_spec = pl.BlockSpec((1, 1, k_tile, D), lambda b, h, qi, ki: (b, h, ki, 0))
    o_spec = pl.BlockSpec((1, 1, q_tile, D), lambda b, h, qi, ki: (b, h, qi, 0))
    scratch = [pltpu.VMEM((q_tile, 1), jnp.float32),   # running max m
               pltpu.VMEM((q_tile, 1), jnp.float32),   # running denom l
               pltpu.VMEM((q_tile, D), jnp.float32)]   # running acc
    dim_sems = ("parallel", "parallel", "parallel", "arbitrary")
    attn_out_shape = jax.ShapeDtypeStruct((B, H, S, D), mxu_dtype)

    if attn_mask is not None:
        assert attn_mask.ndim == 2 and attn_mask.shape == (S, S)
        mask_f = attn_mask.astype(jnp.float32)
        ctx = pl.pallas_call(
            functools.partial(_attn_kernel_dense_mask, mxu_dtype=mxu_dtype),
            out_shape=attn_out_shape,
            grid_spec=pltpu.PrefetchScalarGridSpec(
                num_scalar_prefetch=0,
                grid=(B, H, qt, kt),
                in_specs=[
                    pl.BlockSpec((q_tile, k_tile), lambda b, h, qi, ki: (qi, ki)),
                    q_spec, kv_spec, kv_spec,
                ],
                out_specs=o_spec,
                scratch_shapes=scratch),
            compiler_params=pltpu.CompilerParams(
                dimension_semantics=dim_sems, vmem_limit_bytes=vmem_limit),
        )(mask_f, qh, kh, vh)
    else:
        ctx = pl.pallas_call(
            functools.partial(_attn_kernel, causal=causal,
                              tq=q_tile, tk=k_tile, mxu_dtype=mxu_dtype),
            out_shape=attn_out_shape,
            grid_spec=pltpu.PrefetchScalarGridSpec(
                num_scalar_prefetch=0,
                grid=(B, H, qt, kt),
                in_specs=[q_spec, kv_spec, kv_spec],
                out_specs=o_spec,
                scratch_shapes=scratch),
            compiler_params=pltpu.CompilerParams(
                dimension_semantics=dim_sems, vmem_limit_bytes=vmem_limit),
        )(qh, kh, vh)

    # (B, H, S, D) -> (B, S, E) for the lane-dense output projection.
    ctx = ctx.transpose(0, 2, 1, 3).reshape(B, S, E)

    # ---------------- Stage 3: output projection ------------------------------
    out = pl.pallas_call(
        functools.partial(_out_proj_kernel, mxu_dtype=mxu_dtype),
        out_shape=jax.ShapeDtypeStruct((B, S, E), jnp.float32),
        grid_spec=pltpu.PrefetchScalarGridSpec(
            num_scalar_prefetch=0,
            grid=(B, st),
            in_specs=[
                pl.BlockSpec((1, s_tile, E), lambda b, si: (b, si, 0)),
                pl.BlockSpec((E, E),         lambda b, si: (0, 0)),
                pl.BlockSpec((1, E),         lambda b, si: (0, 0)),
            ],
            out_specs=pl.BlockSpec((1, s_tile, E), lambda b, si: (b, si, 0)),
        ),
        compiler_params=pltpu.CompilerParams(
            dimension_semantics=("parallel", "parallel"),
            vmem_limit_bytes=vmem_limit),
    )(ctx, wo.astype(mxu_dtype), bo.astype(jnp.float32))
    return out


# ---------------------------------------------------------------------------
# Pure-JAX reference mirroring the PyTorch forward (f32, exact softmax).
# ---------------------------------------------------------------------------
def _reference(query, key, value, attn_mask, params, *, num_heads):
    wq, bq, wk, bk, wv, bv, wo, bo = params
    B, S, E = query.shape
    D = E // num_heads

    def proj(x, w, b):
        return x @ w + b[0]

    q = proj(query, wq, bq).reshape(B, S, num_heads, D).transpose(0, 2, 1, 3)
    k = proj(key, wk, bk).reshape(B, S, num_heads, D).transpose(0, 2, 1, 3)
    v = proj(value, wv, bv).reshape(B, S, num_heads, D).transpose(0, 2, 1, 3)

    scores = jnp.einsum('bhqd,bhkd->bhqk', q, k) / math.sqrt(D)
    if attn_mask is not None:
        scores = jnp.where(attn_mask[None, None] == 0, -jnp.inf, scores)
    attn = jax.nn.softmax(scores, axis=-1)
    ctx = jnp.einsum('bhqk,bhkd->bhqd', attn, v)
    ctx = ctx.transpose(0, 2, 1, 3).reshape(B, S, E)
    return ctx @ wo + bo[0]


if __name__ == "__main__":
    B, S, E, H = 2, 8, 32, 4

    key0 = jax.random.PRNGKey(0)
    ks = jax.random.split(key0, 12)

    def init_w(kk):
        return jax.random.normal(kk, (E, E), jnp.float32) / math.sqrt(E)

    def init_b(kk):
        return 0.1 * jax.random.normal(kk, (1, E), jnp.float32)

    params = (init_w(ks[0]), init_b(ks[1]),
              init_w(ks[2]), init_b(ks[3]),
              init_w(ks[4]), init_b(ks[5]),
              init_w(ks[6]), init_b(ks[7]))

    query = jax.random.normal(ks[8], (B, S, E), jnp.float32)
    key_t = jax.random.normal(ks[9], (B, S, E), jnp.float32)
    value = jax.random.normal(ks[10], (B, S, E), jnp.float32)

    # Causal mask (1 => attend, 0 => masked) used only by the reference; the
    # kernel generates it in-kernel from iota when causal=True.
    causal_mask = jnp.tril(jnp.ones((S, S), jnp.float32))

    # Path 1: in-kernel causal mask (no dense mask shipped to the device).
    out_causal = masked_multihead_attention(query, key_t, value, params,
                                            num_heads=H, causal=True)
    out_causal = jax.block_until_ready(out_causal)
    ref_causal = _reference(query, key_t, value, causal_mask, params, num_heads=H)
    assert out_causal.shape == (B, S, E)
    # Tolerance reflects the bf16-MXU default (f32 accumulation) + EUP approx
    # reciprocal; mxu_dtype=jnp.float32 gives ~1e-5 parity.
    assert jnp.allclose(out_causal, ref_causal, atol=5e-2, rtol=5e-2), \
        "causal path mismatch vs reference"

    # Path 2: arbitrary dense attn_mask (diagonal kept so no fully-masked rows).
    rand_mask = (jax.random.uniform(ks[11], (S, S)) > 0.3).astype(jnp.float32)
    rand_mask = jnp.maximum(rand_mask, jnp.eye(S, dtype=jnp.float32))
    out_masked = masked_multihead_attention(query, key_t, value, params,
                                            num_heads=H, attn_mask=rand_mask)
    out_masked = jax.block_until_ready(out_masked)
    ref_masked = _reference(query, key_t, value, rand_mask, params, num_heads=H)
    assert jnp.allclose(out_masked, ref_masked, atol=5e-2, rtol=5e-2), \
        "dense-mask path mismatch vs reference"

    print("KERNEL_OK")
</pallas_src>

<mosaic_0001>
module attributes {stable_mosaic.version = 11 : i64} {
  func.func @_qkv_proj_kernel(%arg0: i32, %arg1: i32, %arg2: memref<1x8x32xf32, #tpu.memory_space<vmem>>, %arg3: memref<1x8x32xf32, #tpu.memory_space<vmem>>, %arg4: memref<1x8x32xf32, #tpu.memory_space<vmem>>, %arg5: memref<3x32x32xbf16, #tpu.memory_space<vmem>>, %arg6: memref<3x1x32xf32, #tpu.memory_space<vmem>>, %arg7: memref<1x8x32xbf16, #tpu.memory_space<vmem>>, %arg8: memref<1x8x32xbf16, #tpu.memory_space<vmem>>, %arg9: memref<1x8x32xbf16, #tpu.memory_space<vmem>>) attributes {dimension_semantics = [#tpu.dimension_semantics<parallel>, #tpu.dimension_semantics<parallel>], iteration_bounds = array<i64: 2, 1>, scalar_prefetch = 0 : i64, scratch_operands = 0 : i64, tpu.core_type = #tpu.core_type<tc>, window_params = [{transform_indices = @transform_0, window_bounds = array<i64: 1, 8, 32>}, {transform_indices = @transform_1, window_bounds = array<i64: 1, 8, 32>}, {transform_indices = @transform_2, window_bounds = array<i64: 1, 8, 32>}, {pipeline_mode = #tpu.pipeline_mode<synchronous>, transform_indices = @transform_3, window_bounds = array<i64: 3, 32, 32>}, {pipeline_mode = #tpu.pipeline_mode<synchronous>, transform_indices = @transform_4, window_bounds = array<i64: 3, 1, 32>}, {transform_indices = @transform_5, window_bounds = array<i64: 1, 8, 32>}, {transform_indices = @transform_6, window_bounds = array<i64: 1, 8, 32>}, {transform_indices = @transform_7, window_bounds = array<i64: 1, 8, 32>}]} {
    %c0 = arith.constant 0 : index
    %c0_0 = arith.constant 0 : index
    %c0_1 = arith.constant 0 : index
    %0 = vector.load %arg2[%c0, %c0_0, %c0_1] : memref<1x8x32xf32, #tpu.memory_space<vmem>>, vector<1x8x32xf32>
    %1 = vector.shape_cast %0 : vector<1x8x32xf32> to vector<8x32xf32>
    %c0_2 = arith.constant 0 : index
    %c0_3 = arith.constant 0 : index
    %c0_4 = arith.constant 0 : index
    %2 = vector.load %arg5[%c0_2, %c0_3, %c0_4] : memref<3x32x32xbf16, #tpu.memory_space<vmem>>, vector<1x32x32xbf16>
    %3 = vector.shape_cast %2 : vector<1x32x32xbf16> to vector<32x32xbf16>
    %4 = arith.truncf %1 : vector<8x32xf32> to vector<8x32xbf16>
    %cst = arith.constant dense<0.000000e+00> : vector<8x32xf32>
    %5 = tpu.matmul %4, %3, %cst {dimension_numbers = #tpu.dot_dimension_numbers<[1], [0], [0], [1], [0, 0, 1, 1], [], []>} : vector<8x32xbf16>, vector<32x32xbf16>, vector<8x32xf32> -> vector<8x32xf32>
    %c0_5 = arith.constant 0 : index
    %c0_6 = arith.constant 0 : index
    %c0_7 = arith.constant 0 : index
    %6 = vector.load %arg6[%c0_5, %c0_6, %c0_7] : memref<3x1x32xf32, #tpu.memory_space<vmem>>, vector<1x1x32xf32>
    %7 = vector.shape_cast %6 : vector<1x1x32xf32> to vector<1x32xf32>
    %8 = vector.broadcast %7 : vector<1x32xf32> to vector<8x32xf32>
    %9 = arith.addf %5, %8 : vector<8x32xf32>
    %c0_8 = arith.constant 0 : index
    %c0_9 = arith.constant 0 : index
    %c0_10 = arith.constant 0 : index
    %10 = vector.load %arg3[%c0_8, %c0_9, %c0_10] : memref<1x8x32xf32, #tpu.memory_space<vmem>>, vector<1x8x32xf32>
    %11 = vector.shape_cast %10 : vector<1x8x32xf32> to vector<8x32xf32>
    %c1 = arith.constant 1 : index
    %c0_11 = arith.constant 0 : index
    %c0_12 = arith.constant 0 : index
    %12 = vector.load %arg5[%c1, %c0_11, %c0_12] : memref<3x32x32xbf16, #tpu.memory_space<vmem>>, vector<1x32x32xbf16>
    %13 = vector.shape_cast %12 : vector<1x32x32xbf16> to vector<32x32xbf16>
    %14 = arith.truncf %11 : vector<8x32xf32> to vector<8x32xbf16>
    %cst_13 = arith.constant dense<0.000000e+00> : vector<8x32xf32>
    %15 = tpu.matmul %14, %13, %cst_13 {dimension_numbers = #tpu.dot_dimension_numbers<[1], [0], [0], [1], [0, 0, 1, 1], [], []>} : vector<8x32xbf16>, vector<32x32xbf16>, vector<8x32xf32> -> vector<8x32xf32>
    %c1_14 = arith.constant 1 : index
    %c0_15 = arith.constant 0 : index
    %c0_16 = arith.constant 0 : index
    %16 = vector.load %arg6[%c1_14, %c0_15, %c0_16] : memref<3x1x32xf32, #tpu.memory_space<vmem>>, vector<1x1x32xf32>
    %17 = vector.shape_cast %16 : vector<1x1x32xf32> to vector<1x32xf32>
    %18 = vector.broadcast %17 : vector<1x32xf32> to vector<8x32xf32>
    %19 = arith.addf %15, %18 : vector<8x32xf32>
    %c0_17 = arith.constant 0 : index
    %c0_18 = arith.constant 0 : index
    %c0_19 = arith.constant 0 : index
    %20 = vector.load %arg4[%c0_17, %c0_18, %c0_19] : memref<1x8x32xf32, #tpu.memory_space<vmem>>, vector<1x8x32xf32>
    %21 = vector.shape_cast %20 : vector<1x8x32xf32> to vector<8x32xf32>
    %c2 = arith.constant 2 : index
    %c0_20 = arith.constant 0 : index
    %c0_21 = arith.constant 0 : index
    %22 = vector.load %arg5[%c2, %c0_20, %c0_21] : memref<3x32x32xbf16, #tpu.memory_space<vmem>>, vector<1x32x32xbf16>
    %23 = vector.shape_cast %22 : vector<1x32x32xbf16> to vector<32x32xbf16>
    %24 = arith.truncf %21 : vector<8x32xf32> to vector<8x32xbf16>
    %cst_22 = arith.constant dense<0.000000e+00> : vector<8x32xf32>
    %25 = tpu.matmul %24, %23, %cst_22 {dimension_numbers = #tpu.dot_dimension_numbers<[1], [0], [0], [1], [0, 0, 1, 1], [], []>} : vector<8x32xbf16>, vector<32x32xbf16>, vector<8x32xf32> -> vector<8x32xf32>
    %c2_23 = arith.constant 2 : index
    %c0_24 = arith.constant 0 : index
    %c0_25 = arith.constant 0 : index
    %26 = vector.load %arg6[%c2_23, %c0_24, %c0_25] : memref<3x1x32xf32, #tpu.memory_space<vmem>>, vector<1x1x32xf32>
    %27 = vector.shape_cast %26 : vector<1x1x32xf32> to vector<1x32xf32>
    %28 = vector.broadcast %27 : vector<1x32xf32> to vector<8x32xf32>
    %29 = arith.addf %25, %28 : vector<8x32xf32>
    %cst_26 = arith.constant 0.353553385 : f32
    %30 = vector.broadcast %cst_26 : f32 to vector<8x32xf32>
    %31 = arith.mulf %9, %30 : vector<8x32xf32>
    %32 = arith.truncf %31 : vector<8x32xf32> to vector<8x32xbf16>
    %c0_27 = arith.constant 0 : index
    %c0_28 = arith.constant 0 : index
    %c0_29 = arith.constant 0 : index
    %33 = vector.load %arg7[%c0_27, %c0_28, %c0_29] : memref<1x8x32xbf16, #tpu.memory_space<vmem>>, vector<1x8x32xbf16>
    %34 = vector.shape_cast %33 : vector<1x8x32xbf16> to vector<8x32xbf16>
    %35 = vector.shape_cast %32 : vector<8x32xbf16> to vector<1x8x32xbf16>
    tpu.vector_store %arg7[%c0_27, %c0_28, %c0_29], %35 {strides = array<i32>} : memref<1x8x32xbf16, #tpu.memory_space<vmem>>, vector<1x8x32xbf16>,
    %36 = arith.truncf %19 : vector<8x32xf32> to vector<8x32xbf16>
    %c0_30 = arith.constant 0 : index
    %c0_31 = arith.constant 0 : index
    %c0_32 = arith.constant 0 : index
    %37 = vector.load %arg8[%c0_30, %c0_31, %c0_32] : memref<1x8x32xbf16, #tpu.memory_space<vmem>>, vector<1x8x32xbf16>
    %38 = vector.shape_cast %37 : vector<1x8x32xbf16> to vector<8x32xbf16>
    %39 = vector.shape_cast %36 : vector<8x32xbf16> to vector<1x8x32xbf16>
    tpu.vector_store %arg8[%c0_30, %c0_31, %c0_32], %39 {strides = array<i32>} : memref<1x8x32xbf16, #tpu.memory_space<vmem>>, vector<1x8x32xbf16>,
    %40 = arith.truncf %29 : vector<8x32xf32> to vector<8x32xbf16>
    %c0_33 = arith.constant 0 : index
    %c0_34 = arith.constant 0 : index
    %c0_35 = arith.constant 0 : index
    %41 = vector.load %arg9[%c0_33, %c0_34, %c0_35] : memref<1x8x32xbf16, #tpu.memory_space<vmem>>, vector<1x8x32xbf16>
    %42 = vector.shape_cast %41 : vector<1x8x32xbf16> to vector<8x32xbf16>
    %43 = vector.shape_cast %40 : vector<8x32xbf16> to vector<1x8x32xbf16>
    tpu.vector_store %arg9[%c0_33, %c0_34, %c0_35], %43 {strides = array<i32>} : memref<1x8x32xbf16, #tpu.memory_space<vmem>>, vector<1x8x32xbf16>,
    return
  }
  func.func @transform_0(%arg0: i32, %arg1: i32) -> (i32, i32, i32) {
    %c0_i32 = arith.constant 0 : i32
    %c0_i32_0 = arith.constant 0 : i32
    return %arg0, %arg1, %c0_i32 : i32, i32, i32
  }
  func.func @transform_1(%arg0: i32, %arg1: i32) -> (i32, i32, i32) {
    %c0_i32 = arith.constant 0 : i32
    %c0_i32_0 = arith.constant 0 : i32
    return %arg0, %arg1, %c0_i32 : i32, i32, i32
  }
  func.func @transform_2(%arg0: i32, %arg1: i32) -> (i32, i32, i32) {
    %c0_i32 = arith.constant 0 : i32
    %c0_i32_0 = arith.constant 0 : i32
    return %arg0, %arg1, %c0_i32 : i32, i32, i32
  }
  func.func @transform_3(%arg0: i32, %arg1: i32) -> (i32, i32, i32) {
    %c0_i32 = arith.constant 0 : i32
    %c0_i32_0 = arith.constant 0 : i32
    %c0_i32_1 = arith.constant 0 : i32
    %c0_i32_2 = arith.constant 0 : i32
    return %c0_i32, %c0_i32_0, %c0_i32_1 : i32, i32, i32
  }
  func.func @transform_4(%arg0: i32, %arg1: i32) -> (i32, i32, i32) {
    %c0_i32 = arith.constant 0 : i32
    %c0_i32_0 = arith.constant 0 : i32
    %c0_i32_1 = arith.constant 0 : i32
    %c0_i32_2 = arith.constant 0 : i32
    return %c0_i32, %c0_i32_0, %c0_i32_1 : i32, i32, i32
  }
  func.func @transform_5(%arg0: i32, %arg1: i32) -> (i32, i32, i32) {
    %c0_i32 = arith.constant 0 : i32
    %c0_i32_0 = arith.constant 0 : i32
    return %arg0, %arg1, %c0_i32 : i32, i32, i32
  }
  func.func @transform_6(%arg0: i32, %arg1: i32) -> (i32, i32, i32) {
    %c0_i32 = arith.constant 0 : i32
    %c0_i32_0 = arith.constant 0 : i32
    return %arg0, %arg1, %c0_i32 : i32, i32, i32
  }
  func.func @transform_7(%arg0: i32, %arg1: i32) -> (i32, i32, i32) {
    %c0_i32 = arith.constant 0 : i32
    %c0_i32_0 = arith.constant 0 : i32
    return %arg0, %arg1, %c0_i32 : i32, i32, i32
  }
}

</mosaic_0001>

<llo_original>
// kernel: tpu_custom_call.1
$region0: #{tpu_custom_call.1}
  #allocation0 [shape = 'u32[]', space=smem, size = 0x4, offset = 0x4, fixed_abs, tag = 'smem constant byte address 0x4 - core index']
  #allocation1 [shape = 'u32[72,128]{1,0:T(1,128)}', space=vmem, size = 0x9000, scoped, tag = 'internal scratch']
  %s0 = inlined_call_operand.hbm [shape: f32[2,8,32], index: 0, kind: input, shape index: {}]
  %s1 = inlined_call_operand.hbm [shape: f32[2,8,32], index: 1, kind: input, shape index: {}]
  %s2 = inlined_call_operand.hbm [shape: f32[2,8,32], index: 2, kind: input, shape index: {}]
  %s3 = inlined_call_operand.hbm [shape: bf16[3,32,32], index: 3, kind: input, shape index: {}]
  %s4 = inlined_call_operand.vmem [shape: f32[3,1,32], index: 4, kind: input, shape index: {}]
  %s5 = inlined_call_operand.hbm [shape: bf16[2,8,32], index: 5, kind: output, shape index: {0}]
  %s6 = inlined_call_operand.hbm [shape: bf16[2,8,32], index: 6, kind: output, shape index: {1}]
  %s7 = inlined_call_operand.hbm [shape: bf16[2,8,32], index: 7, kind: output, shape index: {2}]
  %8 = xla_tuple %s5, %s6, %s7
  %s9 = sld [smem:[#allocation0]]
  $region85: #{tpu_custom_call.1} parent=0
    _
  %s11 = ssub.s32 1, %s9
  %s12 = scalar_select 0, %s11, %s9
  $region1: #{tpu_custom_call.1} parent=0
    #allocation2 [shape = 'u8[8192]{0}', space=vmem, size = 0x2000, scoped, tag = 'input window, operand 0']
    #allocation3 [shape = 's32[2]{0}', space=sflag, size = 0x8, scoped, tag = 'scoped memory for tpu_custom_call.1']
    #allocation4 [shape = 's32[2]{0}', space=sflag, size = 0x8, scoped, tag = 'scoped memory for tpu_custom_call.1']
    #allocation5 [shape = 'u8[8192]{0}', space=vmem, size = 0x2000, scoped, tag = 'input window, operand 1']
    #allocation6 [shape = 's32[2]{0}', space=sflag, size = 0x8, scoped, tag = 'scoped memory for tpu_custom_call.1']
    #allocation7 [shape = 'u8[8192]{0}', space=vmem, size = 0x2000, scoped, tag = 'input window, operand 2']
    #allocation8 [shape = 'u8[24576]{0}', space=vmem, size = 0x6000, scoped, tag = 'input window, operand 3, single buffered']
    #allocation9 [shape = 's32[1]{0}', space=sflag, size = 0x4, scoped, tag = 'scoped memory for tpu_custom_call.1']
    #allocation10 [shape = 'u8[4096]{0}', space=vmem, size = 0x1000, scoped, tag = 'output window, operand 0']
    #allocation11 [shape = 'u8[4096]{0}', space=vmem, size = 0x1000, scoped, tag = 'output window, operand 1']
    #allocation12 [shape = 's32[2]{0}', space=sflag, size = 0x8, scoped, tag = 'scoped memory for tpu_custom_call.1']
    #allocation13 [shape = 'u8[4096]{0}', space=vmem, size = 0x1000, scoped, tag = 'output window, operand 2']
    %13 = vsyncpa [#allocation3], 0
    %s14 = scalar_lea.sflag [#allocation3], 1
    %15 = vsyncpa %s14, 0
    %16 = vsyncpa [#allocation6], 0
    %s17 = scalar_lea.sflag [#allocation6], 1
    %18 = vsyncpa %s17, 0
    %19 = vsyncpa [#allocation9], 0
    %20 = vsyncpa [#allocation4], 0
    %s21 = scalar_lea.sflag [#allocation4], 1
    %22 = vsyncpa %s21, 0
    %23 = vsyncpa [#allocation12], 0
    %s24 = scalar_lea.sflag [#allocation12], 1
    %25 = vsyncpa %s24, 0
    loop: start=0, step=1, limit=4
    $region2: #{tpu_custom_call.1} parent=1 // loop_pre_header
      _
    $region3: #{tpu_custom_call.1} parent=1 // loop_header
      %s27 = sphi 0, %s31
      %p28 = scmp.ge.s32.totalorder %s27, 4
      %s34 = sphi 0, %s46
      %s35 = sphi 0, %s42
      %s36 = sphi 0, %s34
      %s37 = sphi 0, %s35
      %s38 = sphi 0, %s36
      %s39 = sphi 0, %s37
      %s51 = sphi 0, %s53
      %s54 = sphi 0, %s51
      %s55 = sphi 0, %s54
      %s71 = sphi 0, %s55
      %s79 = sphi 0, %s81
      %s82 = sphi 0, %s79
      %s83 = sphi 0, %s82
      %s99 = sphi 0, %s83
      %s107 = sphi 0, %s109
      %s110 = sphi 0, %s107
      %s111 = sphi 0, %s110
      %s127 = sphi 0, %s111
      %s131 = sphi 0, %s131
      %s133 = sphi 0, %s131
      %s134 = sphi 0, %s133
      %s148 = sphi 0, %s134
      %s152 = sphi 0, %s152
      %s154 = sphi 0, %s152
      %s155 = sphi 0, %s154
      %s169 = sphi 0, %s155
      %s177 = sphi 0, %s179
      %s180 = sphi 0, %s177
      %s181 = sphi 0, %s180
      %s197 = sphi 0, %s181
      %s205 = sphi 0, %s207
      %s208 = sphi 0, %s205
      %s209 = sphi 0, %s208
      %s225 = sphi 0, %s209
      %s233 = sphi 0, %s235
      %s236 = sphi 0, %s233
      %s237 = sphi 0, %s236
      %s253 = sphi 0, %s237
    $region4: #{tpu_custom_call.1} parent=1 // loop_header_branch
      %30 = sbr.rel (%p28) target = $region8
    $region5: #{tpu_custom_call.1} parent=1 // loop_body
      %s32 = ssub.s32 %s27, 1
      %s33 = ssub.s32 %s27, 2
      %s40 = sadd.s32 1, %s35
      %p41 = scmp.ge.s32.totalorder %s40, 1
      %s42 = scalar_select %p41, 0, %s40
      %s43 = sadd.s32 1, %s34
      %s44 = scalar_select %p41, %s43, %s34
      %p45 = scmp.ge.s32.totalorder %s44, 2
      %s46 = scalar_select %p45, 0, %s44
      %s47 = ssub.s32 %s34, %s46
      %s48 = ssub.s32 %s35, %s42
      %s49 = sor.u32 %s47, %s48
      %p50 = scmp.eq.s32.totalorder %s49, 0
      %s52 = sadd.s32 %s51, 1
      %s53 = scalar_select %p50, %s51, %s52
      %p56 = pneg %p50
      %p57 = scmp.eq.s32.totalorder %s27, 1
      %p58 = por %p56, %p57
      %p59 = scmp.ne.s32.totalorder %s51, %s54
      %p60 = scmp.eq.s32.totalorder %s27, 0
      %p61 = por %p59, %p60
      %p62 = scmp.ne.s32.totalorder %s51, %s54
      %p63 = scmp.eq.s32.totalorder %s32, 1
      %p64 = por %p62, %p63
      %p65 = scmp.ne.s32.totalorder %s54, %s55
      %p66 = scmp.eq.s32.totalorder %s32, 0
      %p67 = por %p65, %p66
      %p68 = scmp.ne.s32.totalorder %s54, %s55
      %p69 = scmp.eq.s32.totalorder %s33, 1
      %p70 = por %p68, %p69
      %p72 = scmp.ne.s32.totalorder %s55, %s71
      %p73 = scmp.eq.s32.totalorder %s33, 0
      %p74 = por %p72, %p73
      %s75 = ssub.s32 %s34, %s46
      %s76 = ssub.s32 %s35, %s42
      %s77 = sor.u32 %s75, %s76
      %p78 = scmp.eq.s32.totalorder %s77, 0
      %s80 = sadd.s32 %s79, 1
      %s81 = scalar_select %p78, %s79, %s80
      %p84 = pneg %p78
      %p85 = scmp.eq.s32.totalorder %s27, 1
      %p86 = por %p84, %p85
      %p87 = scmp.ne.s32.totalorder %s79, %s82
      %p88 = scmp.eq.s32.totalorder %s27, 0
      %p89 = por %p87, %p88
      %p90 = scmp.ne.s32.totalorder %s79, %s82
      %p91 = scmp.eq.s32.totalorder %s32, 1
      %p92 = por %p90, %p91
      %p93 = scmp.ne.s32.totalorder %s82, %s83
      %p94 = scmp.eq.s32.totalorder %s32, 0
      %p95 = por %p93, %p94
      %p96 = scmp.ne.s32.totalorder %s82, %s83
      %p97 = scmp.eq.s32.totalorder %s33, 1
      %p98 = por %p96, %p97
      %p100 = scmp.ne.s32.totalorder %s83, %s99
      %p101 = scmp.eq.s32.totalorder %s33, 0
      %p102 = por %p100, %p101
      %s103 = ssub.s32 %s34, %s46
      %s104 = ssub.s32 %s35, %s42
      %s105 = sor.u32 %s103, %s104
      %p106 = scmp.eq.s32.totalorder %s105, 0
      %s108 = sadd.s32 %s107, 1
      %s109 = scalar_select %p106, %s107, %s108
      %p112 = pneg %p106
      %p113 = scmp.eq.s32.totalorder %s27, 1
      %p114 = por %p112, %p113
      %p115 = scmp.ne.s32.totalorder %s107, %s110
      %p116 = scmp.eq.s32.totalorder %s27, 0
      %p117 = por %p115, %p116
      %p118 = scmp.ne.s32.totalorder %s107, %s110
      %p119 = scmp.eq.s32.totalorder %s32, 1
      %p120 = por %p118, %p119
      %p121 = scmp.ne.s32.totalorder %s110, %s111
      %p122 = scmp.eq.s32.totalorder %s32, 0
      %p123 = por %p121, %p122
      %p124 = scmp.ne.s32.totalorder %s110, %s111
      %p125 = scmp.eq.s32.totalorder %s33, 1
      %p126 = por %p124, %p125
      %p128 = scmp.ne.s32.totalorder %s111, %s127
      %p129 = scmp.eq.s32.totalorder %s33, 0
      %p130 = por %p128, %p129
      %s132 = sadd.s32 %s131, 1
      %p135 = scmp.eq.s32.totalorder %s27, 1
      %p136 = scmp.ne.s32.totalorder %s131, %s133
      %p137 = scmp.eq.s32.totalorder %s27, 0
      %p138 = por %p136, %p137
      %p139 = scmp.ne.s32.totalorder %s131, %s133
      %p140 = scmp.eq.s32.totalorder %s32, 1
      %p141 = por %p139, %p140
      %p142 = scmp.ne.s32.totalorder %s133, %s134
      %p143 = scmp.eq.s32.totalorder %s32, 0
      %p144 = por %p142, %p143
      %p145 = scmp.ne.s32.totalorder %s133, %s134
      %p146 = scmp.eq.s32.totalorder %s33, 1
      %p147 = por %p145, %p146
      %p149 = scmp.ne.s32.totalorder %s134, %s148
      %p150 = scmp.eq.s32.totalorder %s33, 0
      %p151 = por %p149, %p150
      %s153 = sadd.s32 %s152, 1
      %p156 = scmp.eq.s32.totalorder %s27, 1
      %p157 = scmp.ne.s32.totalorder %s152, %s154
      %p158 = scmp.eq.s32.totalorder %s27, 0
      %p159 = por %p157, %p158
      %p160 = scmp.ne.s32.totalorder %s152, %s154
      %p161 = scmp.eq.s32.totalorder %s32, 1
      %p162 = por %p160, %p161
      %p163 = scmp.ne.s32.totalorder %s154, %s155
      %p164 = scmp.eq.s32.totalorder %s32, 0
      %p165 = por %p163, %p164
      %p166 = scmp.ne.s32.totalorder %s154, %s155
      %p167 = scmp.eq.s32.totalorder %s33, 1
      %p168 = por %p166, %p167
      %p170 = scmp.ne.s32.totalorder %s155, %s169
      %p171 = scmp.eq.s32.totalorder %s33, 0
      %p172 = por %p170, %p171
      %s173 = ssub.s32 %s34, %s46
      %s174 = ssub.s32 %s35, %s42
      %s175 = sor.u32 %s173, %s174
      %p176 = scmp.eq.s32.totalorder %s175, 0
      %s178 = sadd.s32 %s177, 1
      %s179 = scalar_select %p176, %s177, %s178
      %p182 = pneg %p176
      %p183 = scmp.eq.s32.totalorder %s27, 1
      %p184 = por %p182, %p183
      %p185 = scmp.ne.s32.totalorder %s177, %s180
      %p186 = scmp.eq.s32.totalorder %s27, 0
      %p187 = por %p185, %p186
      %p188 = scmp.ne.s32.totalorder %s177, %s180
      %p189 = scmp.eq.s32.totalorder %s32, 1
      %p190 = por %p188, %p189
      %p191 = scmp.ne.s32.totalorder %s180, %s181
      %p192 = scmp.eq.s32.totalorder %s32, 0
      %p193 = por %p191, %p192
      %p194 = scmp.ne.s32.totalorder %s180, %s181
      %p195 = scmp.eq.s32.totalorder %s33, 1
      %p196 = por %p194, %p195
      %p198 = scmp.ne.s32.totalorder %s181, %s197
      %p199 = scmp.eq.s32.totalorder %s33, 0
      %p200 = por %p198, %p199
      %s201 = ssub.s32 %s34, %s46
      %s202 = ssub.s32 %s35, %s42
      %s203 = sor.u32 %s201, %s202
      %p204 = scmp.eq.s32.totalorder %s203, 0
      %s206 = sadd.s32 %s205, 1
      %s207 = scalar_select %p204, %s205, %s206
      %p210 = pneg %p204
      %p211 = scmp.eq.s32.totalorder %s27, 1
      %p212 = por %p210, %p211
      %p213 = scmp.ne.s32.totalorder %s205, %s208
      %p214 = scmp.eq.s32.totalorder %s27, 0
      %p215 = por %p213, %p214
      %p216 = scmp.ne.s32.totalorder %s205, %s208
      %p217 = scmp.eq.s32.totalorder %s32, 1
      %p218 = por %p216, %p217
      %p219 = scmp.ne.s32.totalorder %s208, %s209
      %p220 = scmp.eq.s32.totalorder %s32, 0
      %p221 = por %p219, %p220
      %p222 = scmp.ne.s32.totalorder %s208, %s209
      %p223 = scmp.eq.s32.totalorder %s33, 1
      %p224 = por %p222, %p223
      %p226 = scmp.ne.s32.totalorder %s209, %s225
      %p227 = scmp.eq.s32.totalorder %s33, 0
      %p228 = por %p226, %p227
      %s229 = ssub.s32 %s34, %s46
      %s230 = ssub.s32 %s35, %s42
      %s231 = sor.u32 %s229, %s230
      %p232 = scmp.eq.s32.totalorder %s231, 0
      %s234 = sadd.s32 %s233, 1
      %s235 = scalar_select %p232, %s233, %s234
      %p238 = pneg %p232
      %p239 = scmp.eq.s32.totalorder %s27, 1
      %p240 = por %p238, %p239
      %p241 = scmp.ne.s32.totalorder %s233, %s236
      %p242 = scmp.eq.s32.totalorder %s27, 0
      %p243 = por %p241, %p242
      %p244 = scmp.ne.s32.totalorder %s233, %s236
      %p245 = scmp.eq.s32.totalorder %s32, 1
      %p246 = por %p244, %p245
      %p247 = scmp.ne.s32.totalorder %s236, %s237
      %p248 = scmp.eq.s32.totalorder %s32, 0
      %p249 = por %p247, %p248
      %p250 = scmp.ne.s32.totalorder %s236, %s237
      %p251 = scmp.eq.s32.totalorder %s33, 1
      %p252 = por %p250, %p251
      %p254 = scmp.ne.s32.totalorder %s237, %s253
      %p255 = scmp.eq.s32.totalorder %s33, 0
      %p256 = por %p254, %p255
      %p257 = scmp.le.s32.totalorder 1, %s27
      %p258 = scmp.lt.s32.totalorder %s27, 3
      %p259 = pnand %p257, %p258
      %p260 = pneg %p259
      // Predicated region
      $region9: #{tpu_custom_call.1} parent=5 // pred_check
        _
      $region10: #{tpu_custom_call.1} parent=5 // pred_check_branch
        %262 = sbr.rel (%p259) target = $region12
      $region11: #{tpu_custom_call.1} parent=5 // pred_region
        %s263 = ssub.s32 %s27, 1
        // Predicated region
        $region13: #{tpu_custom_call.1} parent=11 // pred_check
          %p264 = pneg %p144
        $region14: #{tpu_custom_call.1} parent=11 // pred_check_branch
          %266 = sbr.rel (%p264) target = $region16
        $region15: #{tpu_custom_call.1} parent=11 // pred_region
          %268 = vsyncadd [#allocation9], 0
          %s269 = sshll.u32 %s3, 4
          %s270 = int_to_ptr.hbm [resolvable:$true] %s269
          %s271 = sshll.u32 [#allocation8], 4
          %s272 = int_to_ptr.vmem [resolvable:$true] %s271
          %277 = dma.hbm_to_vmem [thread:$0]  %s270, 768, %s272, [#allocation9], 64, 64, 4
        $region16: #{tpu_custom_call.1} parent=11 // pred_fallthru
          _
        // Predicated region
        $region17: #{tpu_custom_call.1} parent=11 // pred_check
          %p278 = pneg %p165
        $region18: #{tpu_custom_call.1} parent=11 // pred_check_branch
          %280 = sbr.rel (%p278) target = $region20
        $region19: #{tpu_custom_call.1} parent=11 // pred_region
          _
        $region20: #{tpu_custom_call.1} parent=11 // pred_fallthru
          _
      $region12: #{tpu_custom_call.1} parent=5 // pred_fallthru
        _
      %p281 = scmp.lt.s32.totalorder %s27, 2
      // Predicated region
      $region21: #{tpu_custom_call.1} parent=5 // pred_check
        %p282 = pneg %p281
      $region22: #{tpu_custom_call.1} parent=5 // pred_check_branch
        %284 = sbr.rel (%p282) target = $region24
      $region23: #{tpu_custom_call.1} parent=5 // pred_region
        // Predicated region
        $region25: #{tpu_custom_call.1} parent=23 // pred_check
          %p285 = pneg %p61
        $region26: #{tpu_custom_call.1} parent=23 // pred_check_branch
          %287 = sbr.rel (%p285) target = $region28
        $region27: #{tpu_custom_call.1} parent=23 // pred_region
          %s288 = sand.u32 %s51, 1
          %s289 = scalar_lea.sflag [#allocation3], %s288
          %s290 = sand.u32 %s51, 1
          %s291 = smul.addr %s290, 8
          %s292 = scalar_lea.vmem [#allocation2], %s291
          %294 = vsyncadd %s289, 0
          %s295 = sadd.s32 %s35, %s34
          %s296 = smul.addr %s295, 8
          %s297 = scalar_lea.hbm %s0, %s296
          %s299 = sshll.u32 %s297, 4
          %s300 = int_to_ptr.hbm [resolvable:$true] %s299
          %s301 = sshll.u32 %s292, 4
          %s302 = int_to_ptr.vmem [resolvable:$true] %s301
          %304 = dma.hbm_to_vmem [thread:$0]  %s300, 128, %s302, %s289
        $region28: #{tpu_custom_call.1} parent=23 // pred_fallthru
          _
        // Predicated region
        $region29: #{tpu_custom_call.1} parent=23 // pred_check
          %p305 = pneg %p89
        $region30: #{tpu_custom_call.1} parent=23 // pred_check_branch
          %307 = sbr.rel (%p305) target = $region32
        $region31: #{tpu_custom_call.1} parent=23 // pred_region
          %s308 = sand.u32 %s27, 1
          %s309 = scalar_lea.sflag [#allocation6], %s308
          %s310 = sand.u32 %s79, 1
          %s311 = smul.addr %s310, 8
          %s312 = scalar_lea.vmem [#allocation5], %s311
          %314 = vsyncadd %s309, 0
          %s315 = sadd.s32 %s35, %s34
          %s316 = smul.addr %s315, 8
          %s317 = scalar_lea.hbm %s1, %s316
          %s319 = sshll.u32 %s317, 4
          %s320 = int_to_ptr.hbm [resolvable:$true] %s319
          %s321 = sshll.u32 %s312, 4
          %s322 = int_to_ptr.vmem [resolvable:$true] %s321
          %324 = dma.hbm_to_vmem [thread:$0]  %s320, 128, %s322, %s309
        $region32: #{tpu_custom_call.1} parent=23 // pred_fallthru
          _
        // Predicated region
        $region33: #{tpu_custom_call.1} parent=23 // pred_check
          %p325 = pneg %p117
        $region34: #{tpu_custom_call.1} parent=23 // pred_check_branch
          %327 = sbr.rel (%p325) target = $region36
        $region35: #{tpu_custom_call.1} parent=23 // pred_region
          %s328 = sand.u32 %s27, 1
          %s329 = scalar_lea.sflag [#allocation6], %s328
          %s330 = sand.u32 %s107, 1
          %s331 = smul.addr %s330, 8
          %s332 = scalar_lea.vmem [#allocation7], %s331
          %334 = vsyncadd %s329, 0
          %s335 = sadd.s32 %s35, %s34
          %s336 = smul.addr %s335, 8
          %s337 = scalar_lea.hbm %s2, %s336
          %s339 = sshll.u32 %s337, 4
          %s340 = int_to_ptr.hbm [resolvable:$true] %s339
          %s341 = sshll.u32 %s332, 4
          %s342 = int_to_ptr.vmem [resolvable:$true] %s341
          %344 = dma.hbm_to_vmem [thread:$0]  %s340, 128, %s342, %s329
        $region36: #{tpu_custom_call.1} parent=23 // pred_fallthru
          _
      $region24: #{tpu_custom_call.1} parent=5 // pred_fallthru
        _
      %p345 = scmp.le.s32.totalorder 1, %s27
      %p346 = scmp.lt.s32.totalorder %s27, 3
      %p347 = pnand %p345, %p346
      %p348 = pneg %p347
      // Predicated region
      $region37: #{tpu_custom_call.1} parent=5 // pred_check
        _
      $region38: #{tpu_custom_call.1} parent=5 // pred_check_branch
        %350 = sbr.rel (%p347) target = $region40
      $region39: #{tpu_custom_call.1} parent=5 // pred_region
        %s351 = ssub.s32 %s27, 1
        %s352 = sand.u32 %s54, 1
        %s353 = scalar_lea.sflag [#allocation3], %s352
        %s354 = sand.u32 %s54, 1
        %s355 = smul.addr %s354, 8
        %s356 = scalar_lea.vmem [#allocation2], %s355
        // Predicated region
        $region41: #{tpu_custom_call.1} parent=39 // pred_check
          %p357 = pneg %p67
        $region42: #{tpu_custom_call.1} parent=39 // pred_check_branch
          %359 = sbr.rel (%p357) target = $region44
        $region43: #{tpu_custom_call.1} parent=39 // pred_region
          %361 = dma.done %s353, 128
        $region44: #{tpu_custom_call.1} parent=39 // pred_fallthru
          _
        %s362 = sand.u32 %s32, 1
        %s363 = scalar_lea.sflag [#allocation6], %s362
        %s364 = sand.u32 %s82, 1
        %s365 = smul.addr %s364, 8
        %s366 = scalar_lea.vmem [#allocation5], %s365
        // Predicated region
        $region45: #{tpu_custom_call.1} parent=39 // pred_check
          %p367 = pneg %p95
        $region46: #{tpu_custom_call.1} parent=39 // pred_check_branch
          %369 = sbr.rel (%p367) target = $region48
        $region47: #{tpu_custom_call.1} parent=39 // pred_region
          %371 = dma.done %s363, 128
        $region48: #{tpu_custom_call.1} parent=39 // pred_fallthru
          _
        %s372 = sand.u32 %s32, 1
        %s373 = scalar_lea.sflag [#allocation6], %s372
        %s374 = sand.u32 %s110, 1
        %s375 = smul.addr %s374, 8
        %s376 = scalar_lea.vmem [#allocation7], %s375
        // Predicated region
        $region49: #{tpu_custom_call.1} parent=39 // pred_check
          %p377 = pneg %p123
        $region50: #{tpu_custom_call.1} parent=39 // pred_check_branch
          %379 = sbr.rel (%p377) target = $region52
        $region51: #{tpu_custom_call.1} parent=39 // pred_region
          %381 = dma.done %s373, 128
        $region52: #{tpu_custom_call.1} parent=39 // pred_fallthru
          _
        // Predicated region
        $region53: #{tpu_custom_call.1} parent=39 // pred_check
          %p382 = pneg %p144
        $region54: #{tpu_custom_call.1} parent=39 // pred_check_branch
          %384 = sbr.rel (%p382) target = $region56
        $region55: #{tpu_custom_call.1} parent=39 // pred_region
          %386 = dma.done [#allocation9], 768
        $region56: #{tpu_custom_call.1} parent=39 // pred_fallthru
          _
        %s387 = sand.u32 %s54, 1
        %s388 = scalar_lea.sflag [#allocation3], %s387
        %s389 = sand.u32 %s54, 1
        %s390 = smul.addr %s389, 8
        %s391 = scalar_lea.vmem [#allocation2], %s390
        %p392 = pneg %p67
        %p393 = pneg %p64
        %s394 = sand.u32 %s32, 1
        %s395 = scalar_lea.sflag [#allocation6], %s394
        %s396 = sand.u32 %s82, 1
        %s397 = smul.addr %s396, 8
        %s398 = scalar_lea.vmem [#allocation5], %s397
        %p399 = pneg %p95
        %p400 = pneg %p92
        %s401 = sand.u32 %s32, 1
        %s402 = scalar_lea.sflag [#allocation6], %s401
        %s403 = sand.u32 %s110, 1
        %s404 = smul.addr %s403, 8
        %s405 = scalar_lea.vmem [#allocation7], %s404
        %p406 = pneg %p123
        %p407 = pneg %p120
        %p408 = pneg %p144
        %p409 = pneg %p141
        %p410 = pneg %p165
        %p411 = pneg %p162
        %p412 = pneg %p193
        %p413 = pneg %p190
        %s414 = sand.u32 %s180, 1
        %s415 = scalar_lea.sflag [#allocation4], %s414
        %s416 = sand.u32 %s180, 1
        %s417 = smul.addr %s416, 4
        %s418 = scalar_lea.vmem [#allocation10], %s417
        %p419 = pneg %p221
        %p420 = pneg %p218
        %s421 = sand.u32 %s32, 1
        %s422 = scalar_lea.sflag [#allocation12], %s421
        %s423 = sand.u32 %s208, 1
        %s424 = smul.addr %s423, 4
        %s425 = scalar_lea.vmem [#allocation11], %s424
        %p426 = pneg %p249
        %p427 = pneg %p246
        %s428 = sand.u32 %s32, 1
        %s429 = scalar_lea.sflag [#allocation12], %s428
        %s430 = sand.u32 %s236, 1
        %s431 = smul.addr %s430, 4
        %s432 = scalar_lea.vmem [#allocation13], %s431
        %v434 = vld [vmem:[%s356] sm:$0xff]
        %v435 = vld [vmem:[#allocation8] sm:$0xf]
        %v436 = vld [vmem:[#allocation8 + $0x4] sm:$0xf]
        %v437 = vld [vmem:[#allocation8 + $0x8] sm:$0xf]
        %v438 = vld [vmem:[#allocation8 + $0xc] sm:$0xf]
        %v439 = vpack.c.bf16 %v434, %v434
        %v440 = vld [vmem:[%s4] sm:$0x1]
        %v442 = vperm.slane %v440, 0
        %v448 = vunpack.c.l.b16 %v435
        %v449 = vunpack.c.l.b16 %v436
        %v450 = vunpack.c.l.b16 %v437
        %v451 = vunpack.c.l.b16 %v438
        %v452 = vpack.c.b16 %v449, %v448
        %v453 = vpack.c.b16 %v451, %v450
        %vm456 = vcmask 261120
        %v458 = vsel %vm456, %v439, 0
        %460 = vmatpush.bf16.msra.mxu0 0
        %461 = vmatpush.bf16.msra.mxu0 0
        %462 = vmatpush.bf16.msra.mxu0 0
        %463 = vmatpush.bf16.msra.mxu0 0
        %464 = vmatpush.bf16.msra.mxu0 0
        %465 = vmatpush.bf16.msra.mxu0 0
        %466 = vmatpush.bf16.msra.mxu0 %v453
        %467 = vmatpush.bf16.msra.mxu0 %v452
        %468 = vmatmul.bf16.gmra.mxu0 %v458
        %v469 = vpop.f32.mrf.mxu0
        %v470 = vadd.f32 %v442, %v469
        %v471 = vpop.f32.mrf.mxu0
        %472 = vdwg.mxu0
        %v473 = vld [vmem:[%s366] sm:$0xff]
        %s474 = scalar_lea.vmem [#allocation8], 16
        %v475 = vld [vmem:[%s474] sm:$0xf]
        %v476 = vld [vmem:[%s474 + $0x4] sm:$0xf]
        %v477 = vld [vmem:[%s474 + $0x8] sm:$0xf]
        %v478 = vld [vmem:[%s474 + $0xc] sm:$0xf]
        %v479 = vpack.c.bf16 %v473, %v473
        %s480 = scalar_lea.vmem %s4, 1
        %v481 = vld [vmem:[%s480] sm:$0x1]
        %v483 = vperm.slane %v481, 0
        %v489 = vunpack.c.l.b16 %v475
        %v490 = vunpack.c.l.b16 %v476
        %v491 = vunpack.c.l.b16 %v477
        %v492 = vunpack.c.l.b16 %v478
        %v493 = vpack.c.b16 %v490, %v489
        %v494 = vpack.c.b16 %v492, %v491
        %v498 = vsel %vm456, %v479, 0
        %500 = vmatpush.bf16.msra.mxu0 0
        %501 = vmatpush.bf16.msra.mxu0 0
        %502 = vmatpush.bf16.msra.mxu0 0
        %503 = vmatpush.bf16.msra.mxu0 0
        %504 = vmatpush.bf16.msra.mxu0 0
        %505 = vmatpush.bf16.msra.mxu0 0
        %506 = vmatpush.bf16.msra.mxu0 %v494
        %507 = vmatpush.bf16.msra.mxu0 %v493
        %508 = vmatmul.bf16.gmra.mxu0 %v498
        %v509 = vpop.f32.mrf.mxu0
        %v510 = vadd.f32 %v483, %v509
        %v511 = vpop.f32.mrf.mxu0
        %512 = vdwg.mxu0
        %v513 = vld [vmem:[%s376] sm:$0xff]
        %s514 = scalar_lea.vmem [#allocation8], 32
        %v515 = vld [vmem:[%s514] sm:$0xf]
        %v516 = vld [vmem:[%s514 + $0x4] sm:$0xf]
        %v517 = vld [vmem:[%s514 + $0x8] sm:$0xf]
        %v518 = vld [vmem:[%s514 + $0xc] sm:$0xf]
        %v519 = vpack.c.bf16 %v513, %v513
        %s520 = scalar_lea.vmem %s4, 2
        %v521 = vld [vmem:[%s520] sm:$0x1]
        %v523 = vperm.slane %v521, 0
        %v529 = vunpack.c.l.b16 %v515
        %v530 = vunpack.c.l.b16 %v516
        %v531 = vunpack.c.l.b16 %v517
        %v532 = vunpack.c.l.b16 %v518
        %v533 = vpack.c.b16 %v530, %v529
        %v534 = vpack.c.b16 %v532, %v531
        %v538 = vsel %vm456, %v519, 0
        %540 = vmatpush.bf16.msra.mxu0 0
        %541 = vmatpush.bf16.msra.mxu0 0
        %542 = vmatpush.bf16.msra.mxu0 0
        %543 = vmatpush.bf16.msra.mxu0 0
        %544 = vmatpush.bf16.msra.mxu0 0
        %545 = vmatpush.bf16.msra.mxu0 0
        %546 = vmatpush.bf16.msra.mxu0 %v534
        %547 = vmatpush.bf16.msra.mxu0 %v533
        %548 = vmatmul.bf16.gmra.mxu0 %v538
        %v549 = vpop.f32.mrf.mxu0
        %v550 = vadd.f32 %v523, %v549
        %v551 = vpop.f32.mrf.mxu0
        %552 = vdwg.mxu0
        %v553 = vmul.f32 %v470, 0.35355338
        %v554 = vpack.c.bf16 %v553, %v553
        %vm555 = vcmask 257024
        %556 = vst.msk [vmem:[%s418] sm:$0xf] %vm555, %v554
        %v557 = vpack.c.bf16 %v510, %v510
        %558 = vst.msk [vmem:[%s425] sm:$0xf] %vm555, %v557
        %v559 = vpack.c.bf16 %v550, %v550
        %560 = vst.msk [vmem:[%s432] sm:$0xf] %vm555, %v559
        %s561 = sand.u32 %s180, 1
        %s562 = scalar_lea.sflag [#allocation4], %s561
        %s563 = sand.u32 %s180, 1
        %s564 = smul.addr %s563, 4
        %s565 = scalar_lea.vmem [#allocation10], %s564
        %s566 = sand.u32 %s32, 1
        %s567 = scalar_lea.sflag [#allocation12], %s566
        %s568 = sand.u32 %s208, 1
        %s569 = smul.addr %s568, 4
        %s570 = scalar_lea.vmem [#allocation11], %s569
        %s571 = sand.u32 %s32, 1
        %s572 = scalar_lea.sflag [#allocation12], %s571
        %s573 = sand.u32 %s236, 1
        %s574 = smul.addr %s573, 4
        %s575 = scalar_lea.vmem [#allocation13], %s574
        // Predicated region
        $region57: #{tpu_custom_call.1} parent=39 // pred_check
          %p576 = pneg %p190
        $region58: #{tpu_custom_call.1} parent=39 // pred_check_branch
          %578 = sbr.rel (%p576) target = $region60
        $region59: #{tpu_custom_call.1} parent=39 // pred_region
          %580 = vsyncadd %s562, 0
          %s581 = sadd.s32 %s37, %s36
          %s582 = smul.addr %s581, 4
          %s583 = scalar_lea.hbm %s5, %s582
          %s585 = sshll.u32 %s565, 4
          %s586 = int_to_ptr.vmem [resolvable:$true] %s585
          %s587 = sshll.u32 %s583, 4
          %s588 = int_to_ptr.hbm [resolvable:$true] %s587
          %590 = dma.vmem_to_hbm [thread:$0]  %s586, 64, %s588, %s562
        $region60: #{tpu_custom_call.1} parent=39 // pred_fallthru
          _
        // Predicated region
        $region61: #{tpu_custom_call.1} parent=39 // pred_check
          %p591 = pneg %p218
        $region62: #{tpu_custom_call.1} parent=39 // pred_check_branch
          %593 = sbr.rel (%p591) target = $region64
        $region63: #{tpu_custom_call.1} parent=39 // pred_region
          %595 = vsyncadd %s567, 0
          %s596 = sadd.s32 %s37, %s36
          %s597 = smul.addr %s596, 4
          %s598 = scalar_lea.hbm %s6, %s597
          %s600 = sshll.u32 %s570, 4
          %s601 = int_to_ptr.vmem [resolvable:$true] %s600
          %s602 = sshll.u32 %s598, 4
          %s603 = int_to_ptr.hbm [resolvable:$true] %s602
          %605 = dma.vmem_to_hbm [thread:$0]  %s601, 64, %s603, %s567
        $region64: #{tpu_custom_call.1} parent=39 // pred_fallthru
          _
        // Predicated region
        $region65: #{tpu_custom_call.1} parent=39 // pred_check
          %p606 = pneg %p246
        $region66: #{tpu_custom_call.1} parent=39 // pred_check_branch
          %608 = sbr.rel (%p606) target = $region68
        $region67: #{tpu_custom_call.1} parent=39 // pred_region
          %610 = vsyncadd %s572, 0
          %s611 = sadd.s32 %s37, %s36
          %s612 = smul.addr %s611, 4
          %s613 = scalar_lea.hbm %s7, %s612
          %s615 = sshll.u32 %s575, 4
          %s616 = int_to_ptr.vmem [resolvable:$true] %s615
          %s617 = sshll.u32 %s613, 4
          %s618 = int_to_ptr.hbm [resolvable:$true] %s617
          %620 = dma.vmem_to_hbm [thread:$0]  %s616, 64, %s618, %s572
        $region68: #{tpu_custom_call.1} parent=39 // pred_fallthru
          _
      $region40: #{tpu_custom_call.1} parent=5 // pred_fallthru
        _
      %p621 = scmp.le.s32.totalorder 2, %s27
      // Predicated region
      $region69: #{tpu_custom_call.1} parent=5 // pred_check
        %p622 = pneg %p621
      $region70: #{tpu_custom_call.1} parent=5 // pred_check_branch
        %624 = sbr.rel (%p622) target = $region72
      $region71: #{tpu_custom_call.1} parent=5 // pred_region
        %s625 = ssub.s32 %s27, 2
        // Predicated region
        $region73: #{tpu_custom_call.1} parent=71 // pred_check
          %p626 = pneg %p196
        $region74: #{tpu_custom_call.1} parent=71 // pred_check_branch
          %628 = sbr.rel (%p626) target = $region76
        $region75: #{tpu_custom_call.1} parent=71 // pred_region
          %s629 = sand.u32 %s181, 1
          %s630 = scalar_lea.sflag [#allocation4], %s629
          %s631 = sand.u32 %s181, 1
          %s632 = smul.addr %s631, 4
          %s633 = scalar_lea.vmem [#allocation10], %s632
          %635 = dma.done %s630, 64
        $region76: #{tpu_custom_call.1} parent=71 // pred_fallthru
          _
        // Predicated region
        $region77: #{tpu_custom_call.1} parent=71 // pred_check
          %p636 = pneg %p224
        $region78: #{tpu_custom_call.1} parent=71 // pred_check_branch
          %638 = sbr.rel (%p636) target = $region80
        $region79: #{tpu_custom_call.1} parent=71 // pred_region
          %s639 = sand.u32 %s33, 1
          %s640 = scalar_lea.sflag [#allocation12], %s639
          %s641 = sand.u32 %s209, 1
          %s642 = smul.addr %s641, 4
          %s643 = scalar_lea.vmem [#allocation11], %s642
          %645 = dma.done %s640, 64
        $region80: #{tpu_custom_call.1} parent=71 // pred_fallthru
          _
        // Predicated region
        $region81: #{tpu_custom_call.1} parent=71 // pred_check
          %p646 = pneg %p252
        $region82: #{tpu_custom_call.1} parent=71 // pred_check_branch
          %648 = sbr.rel (%p646) target = $region84
        $region83: #{tpu_custom_call.1} parent=71 // pred_region
          %s649 = sand.u32 %s33, 1
          %s650 = scalar_lea.sflag [#allocation12], %s649
          %s651 = sand.u32 %s237, 1
          %s652 = smul.addr %s651, 4
          %s653 = scalar_lea.vmem [#allocation13], %s652
          %655 = dma.done %s650, 64
        $region84: #{tpu_custom_call.1} parent=71 // pred_fallthru
          _
      $region72: #{tpu_custom_call.1} parent=5 // pred_fallthru
        _
    $region6: #{tpu_custom_call.1} parent=1 // loop_footer
      %s31 = sadd.s32 1, %s27
    $region7: #{tpu_custom_call.1} parent=1 // loop_footer_branch
      %26 = sbr.rel target = $region3
    $region8: #{tpu_custom_call.1} parent=1 // loop_exit
      _
    %656 = vsyncpa [#allocation3], 1
    %s657 = scalar_lea.sflag [#allocation3], 1
    %658 = vsyncpa %s657, 1
    %659 = vsyncpa [#allocation6], 1
    %s660 = scalar_lea.sflag [#allocation6], 1
    %661 = vsyncpa %s660, 1
    %662 = vsyncpa [#allocation9], 1
    %663 = vsyncpa [#allocation4], 1
    %s664 = scalar_lea.sflag [#allocation4], 1
    %665 = vsyncpa %s664, 1
    %666 = vsyncpa [#allocation12], 1
    %s667 = scalar_lea.sflag [#allocation12], 1
    %668 = vsyncpa %s667, 1

</llo_original>
